<compile_context>
chip_gen: v7x
topology: tpu7x:2x2x1
jax: 0.10.0
libtpu: 0.0.40
codegen_flags: <defaults>
</compile_context>

<pallas_src>
import functools

import jax
import jax.numpy as jnp
from jax.experimental import pallas as pl
from jax.experimental.pallas import tpu as pltpu


def _chebconv_kernel(x_ref, lap_ref, w_ref, b_ref, o_ref, *, K):
    # x_ref:   (1, N, Bt*F)        f32, one batch group, columns ordered [b][f]
    # lap_ref: (N, N)              bf16 dense laplacian (grid-invariant)
    # w_ref:   (K, Bt*F, Bt*OUT)   bf16 batch-block-diagonal packed weight
    # b_ref:   (1, Bt*OUT)         f32 packed bias
    # o_ref:   (1, N, Bt*OUT)
    lap = lap_ref[...]                                    # bf16 MXU operand
    xk_f32 = x_ref[0]                                     # (N, Bt*F) f32
    xk = xk_f32.astype(lap.dtype)                         # bf16 MXU operand

    # Per-order projection accumulation (f32 accumulator, bf16 operands).
    acc = b_ref[...] + jnp.dot(xk, w_ref[0],
                               preferred_element_type=jnp.float32)
    x_prev_f32 = xk_f32
    for k in range(1, K):
        lx = jnp.dot(lap, xk, preferred_element_type=jnp.float32)
        if k == 1:
            x_new_f32 = lx                                # x1 = L x0
        else:
            x_new_f32 = 2.0 * lx - x_prev_f32             # x_k = 2 L x_{k-1} - x_{k-2}
        x_prev_f32, xk_f32 = xk_f32, x_new_f32
        xk = xk_f32.astype(lap.dtype)
        acc = acc + jnp.dot(xk, w_ref[k],
                            preferred_element_type=jnp.float32)

    o_ref[0] = acc.astype(o_ref.dtype)


@functools.lru_cache(maxsize=None)
def _single_buffer_supported():
    """Capability probe: does this jax build accept pipeline_mode=pl.Buffered(1)?"""
    if not hasattr(pl, "Buffered"):
        return False

    def _probe(a_ref, o_ref):
        o_ref[...] = a_ref[...]

    try:
        fn = pl.pallas_call(
            _probe,
            out_shape=jax.ShapeDtypeStruct((16, 128), jnp.float32),
            grid_spec=pltpu.PrefetchScalarGridSpec(
                num_scalar_prefetch=0,
                grid=(2,),
                in_specs=[pl.BlockSpec((8, 128), lambda i: (0, 0),
                                       pipeline_mode=pl.Buffered(1))],
                out_specs=pl.BlockSpec((8, 128), lambda i: (i, 0)),
            ),
        )
        jax.block_until_ready(fn(jnp.zeros((8, 128), jnp.float32)))
        return True
    except Exception:  # probe only -- real kernel is NOT wrapped in try/except
        return False


def _tpu_vmem_and_cores():
    """Per-generation VMEM capacity and whether the chip has 2 TensorCores."""
    kind = ""
    try:
        kind = jax.devices()[0].device_kind.lower()
    except Exception:
        pass
    two_cores = "v7" in kind
    vmem_cap = None
    try:
        info = pltpu.get_tpu_info()
        vmem_cap = getattr(info, "vmem_capacity_bytes", None)
    except Exception:
        vmem_cap = None
    if vmem_cap is None:
        vmem_cap = (64 if two_cores else 128) * 1024 * 1024
        if not kind:
            vmem_cap = 64 * 1024 * 1024  # unknown device: be conservative
    return int(vmem_cap), two_cores


def _vmem_estimate(N, F, OUT, K, Bt, single_buf):
    """Rough VMEM footprint (bytes) of one grid step, used to size Bt."""
    nbuf_inv = 1 if single_buf else 2
    lap = 2 * N * N * nbuf_inv                       # bf16 L
    w = 2 * K * (Bt * F) * (Bt * OUT) * nbuf_inv     # bf16 packed W
    b = 4 * Bt * OUT * nbuf_inv
    x_blk = 4 * N * Bt * F * 2                       # double-buffered input
    o_blk = 4 * N * Bt * OUT * 2                     # double-buffered output
    live = N * Bt * F * (4 + 4 + 2 + 4) + 4 * N * Bt * OUT
    return lap + w + b + x_blk + o_blk + live


def _pick_batch_tile(B, N, F, OUT, K, vmem_budget, two_cores, single_buf):
    lane_target = 256                                # half-fill 256-wide MXU
    bt = max(1, -(-lane_target // max(F, 1)))        # Bt*F >= 256
    bt = max(bt, -(-128 // max(OUT, 1)))             # Bt*OUT >= 128 (lane-dense stores)
    bt = min(bt, B)
    if two_cores and B > 1:
        bt = min(bt, -(-B // 2))                     # keep >= 2 groups for 2 TCs (v7x)
    while bt > 1 and _vmem_estimate(N, F, OUT, K, bt, single_buf) > vmem_budget:
        bt -= 1
    return max(bt, 1)


def chebnet_conv(x, laplacian, weight, bias, k, *, batch_tile=None):
    """x: (B, N, F) f32; laplacian: (N, N) f32 (dense stand-in for sparse);
    weight: (OUT, K*F) f32 (nn.Linear layout); bias: (OUT,) f32."""
    B, N, F = x.shape
    OUT = weight.shape[0]
    assert weight.shape == (OUT, k * F)
    out_dtype = x.dtype

    vmem_cap, two_cores = _tpu_vmem_and_cores()
    vmem_limit = max(32 * 1024 * 1024, vmem_cap - 8 * 1024 * 1024)
    single_buf = _single_buffer_supported()
    vmem_budget = int(0.75 * vmem_limit)             # headroom for compiler scratch

    if batch_tile is None:
        batch_tile = _pick_batch_tile(B, N, F, OUT, k, vmem_budget,
                                      two_cores, single_buf)
    Bt = int(batch_tile)
    G = -(-B // Bt)                                  # number of batch groups
    Bpad = G * Bt
    if Bpad != B:
        x = jnp.pad(x, ((0, Bpad - B), (0, 0), (0, 0)))

    # Lane-pack x: (Bpad, N, F) -> (G, N, Bt*F), column index = b*F + f.
    x_pk = (x.astype(jnp.float32)
             .reshape(G, Bt, N, F)
             .transpose(0, 2, 1, 3)
             .reshape(G, N, Bt * F))

    # bf16 laplacian for the MXU.
    lap_bf16 = laplacian.astype(jnp.bfloat16)

    # Batch-block-diagonal packed weight, per order, in bf16:
    #   wblk[k, b*F + f, c*OUT + o] = W[o, k*F + f] * (b == c)
    w_kfo = weight.astype(jnp.float32).reshape(OUT, k, F).transpose(1, 2, 0)
    eye_b = jnp.eye(Bt, dtype=jnp.float32)
    wblk = (jnp.einsum("kfo,bc->kbfco", w_kfo, eye_b)
              .reshape(k, Bt * F, Bt * OUT)
              .astype(jnp.bfloat16))
    bias_pk = jnp.tile(bias.astype(jnp.float32), (Bt,)).reshape(1, Bt * OUT)

    kernel = functools.partial(_chebconv_kernel, K=k)

    def inv_spec(shape):
        nd = len(shape)
        index_map = lambda g: (0,) * nd
        if single_buf:
            # Grid-invariant -> single buffer (saves VMEM, esp. the NxN L).
            return pl.BlockSpec(shape, index_map, pipeline_mode=pl.Buffered(1))
        return pl.BlockSpec(shape, index_map)

    grid_spec = pltpu.PrefetchScalarGridSpec(
        num_scalar_prefetch=0,
        grid=(G,),
        in_specs=[
            pl.BlockSpec((1, N, Bt * F), lambda g: (g, 0, 0)),   # x group
            inv_spec((N, N)),                                    # L (bf16)
            inv_spec((k, Bt * F, Bt * OUT)),                     # packed W (bf16)
            inv_spec((1, Bt * OUT)),                             # packed bias
        ],
        out_specs=pl.BlockSpec((1, N, Bt * OUT), lambda g: (g, 0, 0)),
    )

    out_pk = pl.pallas_call(
        kernel,
        out_shape=jax.ShapeDtypeStruct((G, N, Bt * OUT), out_dtype),
        grid_spec=grid_spec,
        compiler_params=pltpu.CompilerParams(
            dimension_semantics=("parallel",),
            vmem_limit_bytes=int(vmem_limit),
        ),
    )(x_pk, lap_bf16, wblk, bias_pk)

    # Unpack (G, N, Bt*OUT) -> (B, N, OUT).
    out = (out_pk.reshape(G, N, Bt, OUT)
                 .transpose(0, 2, 1, 3)
                 .reshape(Bpad, N, OUT))
    return out[:B]


def _reference(x, laplacian, weight, bias, k):
    """Pure-JAX f32 reference mirroring the PyTorch forward."""
    x0 = x
    chebs = [x0]
    if k > 1:
        x1 = jnp.einsum("ij,bjf->bif", laplacian, x0)
        chebs.append(x1)
        for _ in range(2, k):
            x2 = 2.0 * jnp.einsum("ij,bjf->bif", laplacian, x1) - x0
            chebs.append(x2)
            x0, x1 = x1, x2
    cheb = jnp.stack(chebs, axis=2)                        # (B, N, K, F)
    cheb = cheb.reshape(cheb.shape[0], cheb.shape[1], -1)  # (B, N, K*F)
    return cheb @ weight.T + bias


if __name__ == "__main__":
    B, N, F_IN, OUT, K = 4, 16, 8, 32, 3

    key = jax.random.PRNGKey(0)
    kx, kl, kw, kb = jax.random.split(key, 4)

    x = jax.random.normal(kx, (B, N, F_IN), dtype=jnp.float32)

    # Deterministic symmetric "scaled laplacian"-like matrix (dense stand-in
    # for the torch.sparse_coo_tensor argument).
    a = jax.random.normal(kl, (N, N), dtype=jnp.float32)
    lap = 0.5 * (a + a.T) / jnp.float32(N)

    # nn.Linear(in_features*k, out_features) parameters, deterministic init.
    bound = 1.0 / jnp.sqrt(jnp.float32(F_IN * K))
    weight = jax.random.uniform(kw, (OUT, F_IN * K), minval=-bound,
                                maxval=bound, dtype=jnp.float32)
    bias = jax.random.uniform(kb, (OUT,), minval=-bound, maxval=bound,
                              dtype=jnp.float32)

    out = chebnet_conv(x, lap, weight, bias, K)
    out = jax.block_until_ready(out)

    ref = _reference(x, lap, weight, bias, K)
    assert out.shape == (B, N, OUT)
    # bf16 MXU operands (L, x_k, W) vs f32 reference -> loose tolerance
    # (inference-grade precision; use f32 weights if this feeds training).
    err = float(jnp.max(jnp.abs(out - ref)))
    assert jnp.allclose(out, ref, atol=3e-2, rtol=3e-2), err

    print("KERNEL_OK")
</pallas_src>

<mosaic_0001>
module attributes {stable_mosaic.version = 11 : i64} {
  func.func @_probe(%arg0: i32, %arg1: memref<8x128xf32, #tpu.memory_space<vmem>>, %arg2: memref<8x128xf32, #tpu.memory_space<vmem>>) attributes {dimension_semantics = [#tpu.dimension_semantics<arbitrary>], iteration_bounds = array<i64: 2>, scalar_prefetch = 0 : i64, scratch_operands = 0 : i64, tpu.core_type = #tpu.core_type<tc>, window_params = [{pipeline_mode = #tpu.pipeline_mode<synchronous>, transform_indices = @transform_0, window_bounds = array<i64: 8, 128>}, {transform_indices = @transform_1, window_bounds = array<i64: 8, 128>}]} {
    %c0 = arith.constant 0 : index
    %c0_0 = arith.constant 0 : index
    %0 = vector.load %arg1[%c0, %c0_0] : memref<8x128xf32, #tpu.memory_space<vmem>>, vector<8x128xf32>
    %c0_1 = arith.constant 0 : index
    %c0_2 = arith.constant 0 : index
    %1 = vector.load %arg2[%c0_1, %c0_2] : memref<8x128xf32, #tpu.memory_space<vmem>>, vector<8x128xf32>
    tpu.vector_store %arg2[%c0_1, %c0_2], %0 {strides = array<i32>} : memref<8x128xf32, #tpu.memory_space<vmem>>, vector<8x128xf32>,
    return
  }
  func.func @transform_0(%arg0: i32) -> (i32, i32) {
    %c0_i32 = arith.constant 0 : i32
    %c0_i32_0 = arith.constant 0 : i32
    %c0_i32_1 = arith.constant 0 : i32
    return %c0_i32, %c0_i32_0 : i32, i32
  }
  func.func @transform_1(%arg0: i32) -> (i32, i32) {
    %c0_i32 = arith.constant 0 : i32
    %c0_i32_0 = arith.constant 0 : i32
    return %arg0, %c0_i32 : i32, i32
  }
}

module attributes {stable_mosaic.version = 11 : i64} {
  func.func @_chebconv_kernel(%arg0: i32, %arg1: memref<1x16x32xf32, #tpu.memory_space<vmem>>, %arg2: memref<16x16xbf16, #tpu.memory_space<vmem>>, %arg3: memref<3x32x128xbf16, #tpu.memory_space<vmem>>, %arg4: memref<1x128xf32, #tpu.memory_space<vmem>>, %arg5: memref<1x16x128xf32, #tpu.memory_space<vmem>>) attributes {dimension_semantics = [#tpu.dimension_semantics<parallel>], iteration_bounds = array<i64: 1>, scalar_prefetch = 0 : i64, scratch_operands = 0 : i64, tpu.core_type = #tpu.core_type<tc>, window_params = [{transform_indices = @transform_0, window_bounds = array<i64: 1, 16, 32>}, {pipeline_mode = #tpu.pipeline_mode<synchronous>, transform_indices = @transform_1, window_bounds = array<i64: 16, 16>}, {pipeline_mode = #tpu.pipeline_mode<synchronous>, transform_indices = @transform_2, window_bounds = array<i64: 3, 32, 128>}, {pipeline_mode = #tpu.pipeline_mode<synchronous>, transform_indices = @transform_3, window_bounds = array<i64: 1, 128>}, {transform_indices = @transform_4, window_bounds = array<i64: 1, 16, 128>}]} {
    %c0 = arith.constant 0 : index
    %c0_0 = arith.constant 0 : index
    %0 = vector.load %arg2[%c0, %c0_0] : memref<16x16xbf16, #tpu.memory_space<vmem>>, vector<16x16xbf16>
    %c0_1 = arith.constant 0 : index
    %c0_2 = arith.constant 0 : index
    %c0_3 = arith.constant 0 : index
    %1 = vector.load %arg1[%c0_1, %c0_2, %c0_3] : memref<1x16x32xf32, #tpu.memory_space<vmem>>, vector<1x16x32xf32>
    %2 = vector.shape_cast %1 : vector<1x16x32xf32> to vector<16x32xf32>
    %3 = arith.truncf %2 : vector<16x32xf32> to vector<16x32xbf16>
    %c0_4 = arith.constant 0 : index
    %c0_5 = arith.constant 0 : index
    %4 = vector.load %arg4[%c0_4, %c0_5] : memref<1x128xf32, #tpu.memory_space<vmem>>, vector<1x128xf32>
    %c0_6 = arith.constant 0 : index
    %c0_7 = arith.constant 0 : index
    %c0_8 = arith.constant 0 : index
    %5 = vector.load %arg3[%c0_6, %c0_7, %c0_8] : memref<3x32x128xbf16, #tpu.memory_space<vmem>>, vector<1x32x128xbf16>
    %6 = vector.shape_cast %5 : vector<1x32x128xbf16> to vector<32x128xbf16>
    %cst = arith.constant dense<0.000000e+00> : vector<16x128xf32>
    %7 = tpu.matmul %3, %6, %cst {dimension_numbers = #tpu.dot_dimension_numbers<[1], [0], [0], [1], [0, 0, 1, 1], [], []>} : vector<16x32xbf16>, vector<32x128xbf16>, vector<16x128xf32> -> vector<16x128xf32>
    %8 = vector.broadcast %4 : vector<1x128xf32> to vector<16x128xf32>
    %9 = arith.addf %8, %7 : vector<16x128xf32>
    %cst_9 = arith.constant dense<0.000000e+00> : vector<16x32xf32>
    %10 = tpu.matmul %0, %3, %cst_9 {dimension_numbers = #tpu.dot_dimension_numbers<[1], [0], [0], [1], [0, 0, 1, 1], [], []>} : vector<16x16xbf16>, vector<16x32xbf16>, vector<16x32xf32> -> vector<16x32xf32>
    %11 = arith.truncf %10 : vector<16x32xf32> to vector<16x32xbf16>
    %c1 = arith.constant 1 : index
    %c0_10 = arith.constant 0 : index
    %c0_11 = arith.constant 0 : index
    %12 = vector.load %arg3[%c1, %c0_10, %c0_11] : memref<3x32x128xbf16, #tpu.memory_space<vmem>>, vector<1x32x128xbf16>
    %13 = vector.shape_cast %12 : vector<1x32x128xbf16> to vector<32x128xbf16>
    %cst_12 = arith.constant dense<0.000000e+00> : vector<16x128xf32>
    %14 = tpu.matmul %11, %13, %cst_12 {dimension_numbers = #tpu.dot_dimension_numbers<[1], [0], [0], [1], [0, 0, 1, 1], [], []>} : vector<16x32xbf16>, vector<32x128xbf16>, vector<16x128xf32> -> vector<16x128xf32>
    %15 = arith.addf %9, %14 : vector<16x128xf32>
    %cst_13 = arith.constant dense<0.000000e+00> : vector<16x32xf32>
    %16 = tpu.matmul %0, %11, %cst_13 {dimension_numbers = #tpu.dot_dimension_numbers<[1], [0], [0], [1], [0, 0, 1, 1], [], []>} : vector<16x16xbf16>, vector<16x32xbf16>, vector<16x32xf32> -> vector<16x32xf32>
    %cst_14 = arith.constant 2.000000e+00 : f32
    %17 = vector.broadcast %cst_14 : f32 to vector<16x32xf32>
    %18 = arith.mulf %17, %16 : vector<16x32xf32>
    %19 = arith.subf %18, %2 : vector<16x32xf32>
    %20 = arith.truncf %19 : vector<16x32xf32> to vector<16x32xbf16>
    %c2 = arith.constant 2 : index
    %c0_15 = arith.constant 0 : index
    %c0_16 = arith.constant 0 : index
    %21 = vector.load %arg3[%c2, %c0_15, %c0_16] : memref<3x32x128xbf16, #tpu.memory_space<vmem>>, vector<1x32x128xbf16>
    %22 = vector.shape_cast %21 : vector<1x32x128xbf16> to vector<32x128xbf16>
    %cst_17 = arith.constant dense<0.000000e+00> : vector<16x128xf32>
    %23 = tpu.matmul %20, %22, %cst_17 {dimension_numbers = #tpu.dot_dimension_numbers<[1], [0], [0], [1], [0, 0, 1, 1], [], []>} : vector<16x32xbf16>, vector<32x128xbf16>, vector<16x128xf32> -> vector<16x128xf32>
    %24 = arith.addf %15, %23 : vector<16x128xf32>
    %c0_18 = arith.constant 0 : index
    %c0_19 = arith.constant 0 : index
    %c0_20 = arith.constant 0 : index
    %25 = vector.load %arg5[%c0_18, %c0_19, %c0_20] : memref<1x16x128xf32, #tpu.memory_space<vmem>>, vector<1x16x128xf32>
    %26 = vector.shape_cast %25 : vector<1x16x128xf32> to vector<16x128xf32>
    %27 = vector.shape_cast %24 : vector<16x128xf32> to vector<1x16x128xf32>
    tpu.vector_store %arg5[%c0_18, %c0_19, %c0_20], %27 {strides = array<i32>} : memref<1x16x128xf32, #tpu.memory_space<vmem>>, vector<1x16x128xf32>,
    return
  }
  func.func @transform_0(%arg0: i32) -> (i32, i32, i32) {
    %c0_i32 = arith.constant 0 : i32
    %c0_i32_0 = arith.constant 0 : i32
    %c0_i32_1 = arith.constant 0 : i32
    return %arg0, %c0_i32, %c0_i32_0 : i32, i32, i32
  }
  func.func @transform_1(%arg0: i32) -> (i32, i32) {
    %c0_i32 = arith.constant 0 : i32
    %c0_i32_0 = arith.constant 0 : i32
    %c0_i32_1 = arith.constant 0 : i32
    return %c0_i32, %c0_i32_0 : i32, i32
  }
  func.func @transform_2(%arg0: i32) -> (i32, i32, i32) {
    %c0_i32 = arith.constant 0 : i32
    %c0_i32_0 = arith.constant 0 : i32
    %c0_i32_1 = arith.constant 0 : i32
    %c0_i32_2 = arith.constant 0 : i32
    return %c0_i32, %c0_i32_0, %c0_i32_1 : i32, i32, i32
  }
  func.func @transform_3(%arg0: i32) -> (i32, i32) {
    %c0_i32 = arith.constant 0 : i32
    %c0_i32_0 = arith.constant 0 : i32
    %c0_i32_1 = arith.constant 0 : i32
    return %c0_i32, %c0_i32_0 : i32, i32
  }
  func.func @transform_4(%arg0: i32) -> (i32, i32, i32) {
    %c0_i32 = arith.constant 0 : i32
    %c0_i32_0 = arith.constant 0 : i32
    %c0_i32_1 = arith.constant 0 : i32
    return %arg0, %c0_i32, %c0_i32_0 : i32, i32, i32
  }
}

</mosaic_0001>

<llo_original>
// kernel: tpu_custom_call.1
$region0: #{tpu_custom_call.1}
  #allocation0 [shape = 'u32[]', space=smem, size = 0x4, offset = 0x4, fixed_abs, tag = 'smem constant byte address 0x4 - core index']
  #allocation1 [shape = 'u32[144,128]{1,0:T(1,128)}', space=vmem, size = 0x12000, scoped, tag = 'internal scratch']
  %s0 = inlined_call_operand.hbm [shape: f32[8,128], index: 0, kind: input, shape index: {}]
  %s1 = inlined_call_operand.hbm [shape: f32[16,128], index: 1, kind: output, shape index: {}]
  %s2 = sld [smem:[#allocation0]]
  $region41: #{tpu_custom_call.1} parent=0
    _
  %s4 = ssub.s32 1, %s2
  %s5 = scalar_select 0, %s4, %s2
  $region1: #{tpu_custom_call.1} parent=0
    #allocation2 [shape = 'u8[4096]{0}', space=vmem, size = 0x1000, scoped, tag = 'input window, operand 0, single buffered']
    #allocation3 [shape = 's32[2]{0}', space=sflag, size = 0x8, scoped, tag = 'scoped memory for tpu_custom_call.1']
    #allocation4 [shape = 's32[2]{0}', space=sflag, size = 0x8, scoped, tag = 'scoped memory for tpu_custom_call.1']
    #allocation5 [shape = 'u8[8192]{0}', space=vmem, size = 0x2000, scoped, tag = 'output window, operand 0']
    %6 = vsyncpa [#allocation3], 0
    %7 = vsyncpa [#allocation4], 0
    %s8 = scalar_lea.sflag [#allocation4], 1
    %9 = vsyncpa %s8, 0
    loop: start=0, step=1, limit=4
    $region2: #{tpu_custom_call.1} parent=1 // loop_pre_header
      _
    $region3: #{tpu_custom_call.1} parent=1 // loop_header
      %s11 = sphi 0, %s15
      %p12 = scmp.ge.s32.totalorder %s11, 4
      %s19 = sphi 0, %s19
      %s21 = sphi 0, %s19
      %s22 = sphi 0, %s21
      %s36 = sphi 0, %s22
      %s42 = sphi 0, %s44
      %s45 = sphi 0, %s42
      %s46 = sphi 0, %s45
      %s62 = sphi 0, %s46
    $region4: #{tpu_custom_call.1} parent=1 // loop_header_branch
      %14 = sbr.rel (%p12) target = $region8
    $region5: #{tpu_custom_call.1} parent=1 // loop_body
      %s16 = ssub.s32 %s11, 1
      %s17 = ssub.s32 %s11, 2
      %s18 = sadd.s32 %s11, 1
      %s20 = sadd.s32 %s19, 1
      %p23 = scmp.eq.s32.totalorder %s11, 1
      %p24 = scmp.ne.s32.totalorder %s19, %s21
      %p25 = scmp.eq.s32.totalorder %s11, 0
      %p26 = por %p24, %p25
      %p27 = scmp.ne.s32.totalorder %s19, %s21
      %p28 = scmp.eq.s32.totalorder %s16, 1
      %p29 = por %p27, %p28
      %p30 = scmp.ne.s32.totalorder %s21, %s22
      %p31 = scmp.eq.s32.totalorder %s16, 0
      %p32 = por %p30, %p31
      %p33 = scmp.ne.s32.totalorder %s21, %s22
      %p34 = scmp.eq.s32.totalorder %s17, 1
      %p35 = por %p33, %p34
      %p37 = scmp.ne.s32.totalorder %s22, %s36
      %p38 = scmp.eq.s32.totalorder %s17, 0
      %p39 = por %p37, %p38
      %s40 = ssub.s32 %s11, %s18
      %p41 = scmp.eq.s32.totalorder %s40, 0
      %s43 = sadd.s32 %s42, 1
      %s44 = scalar_select %p41, %s42, %s43
      %p47 = pneg %p41
      %p48 = scmp.eq.s32.totalorder %s11, 1
      %p49 = por %p47, %p48
      %p50 = scmp.ne.s32.totalorder %s42, %s45
      %p51 = scmp.eq.s32.totalorder %s11, 0
      %p52 = por %p50, %p51
      %p53 = scmp.ne.s32.totalorder %s42, %s45
      %p54 = scmp.eq.s32.totalorder %s16, 1
      %p55 = por %p53, %p54
      %p56 = scmp.ne.s32.totalorder %s45, %s46
      %p57 = scmp.eq.s32.totalorder %s16, 0
      %p58 = por %p56, %p57
      %p59 = scmp.ne.s32.totalorder %s45, %s46
      %p60 = scmp.eq.s32.totalorder %s17, 1
      %p61 = por %p59, %p60
      %p63 = scmp.ne.s32.totalorder %s46, %s62
      %p64 = scmp.eq.s32.totalorder %s17, 0
      %p65 = por %p63, %p64
      %p66 = scmp.le.s32.totalorder 1, %s11
      %p67 = scmp.lt.s32.totalorder %s11, 3
      %p68 = pnand %p66, %p67
      %p69 = pneg %p68
      // Predicated region
      $region9: #{tpu_custom_call.1} parent=5 // pred_check
        _
      $region10: #{tpu_custom_call.1} parent=5 // pred_check_branch
        %71 = sbr.rel (%p68) target = $region12
      $region11: #{tpu_custom_call.1} parent=5 // pred_region
        %s72 = ssub.s32 %s11, 1
        // Predicated region
        $region13: #{tpu_custom_call.1} parent=11 // pred_check
          %p73 = pneg %p32
        $region14: #{tpu_custom_call.1} parent=11 // pred_check_branch
          %75 = sbr.rel (%p73) target = $region16
        $region15: #{tpu_custom_call.1} parent=11 // pred_region
          %s77 = ssub.s32 128, 128
          %78 = vsyncadd [#allocation3], %s77
          %s80 = sshll.u32 [#allocation2], 4
          %s81 = int_to_ptr.vmem [resolvable:$true] %s80
          %83 = dma.hbm_to_vmem [thread:$0]  %s0, 128, %s81, [#allocation3]
        $region16: #{tpu_custom_call.1} parent=11 // pred_fallthru
          _
      $region12: #{tpu_custom_call.1} parent=5 // pred_fallthru
        _
      %p84 = scmp.lt.s32.totalorder %s11, 2
      // Predicated region
      $region17: #{tpu_custom_call.1} parent=5 // pred_check
        %p85 = pneg %p84
      $region18: #{tpu_custom_call.1} parent=5 // pred_check_branch
        %87 = sbr.rel (%p85) target = $region20
      $region19: #{tpu_custom_call.1} parent=5 // pred_region
        _
      $region20: #{tpu_custom_call.1} parent=5 // pred_fallthru
        _
      %p88 = scmp.le.s32.totalorder 1, %s11
      %p89 = scmp.lt.s32.totalorder %s11, 3
      %p90 = pnand %p88, %p89
      %p91 = pneg %p90
      // Predicated region
      $region21: #{tpu_custom_call.1} parent=5 // pred_check
        _
      $region22: #{tpu_custom_call.1} parent=5 // pred_check_branch
        %93 = sbr.rel (%p90) target = $region24
      $region23: #{tpu_custom_call.1} parent=5 // pred_region
        %s94 = ssub.s32 %s11, 1
        // Predicated region
        $region25: #{tpu_custom_call.1} parent=23 // pred_check
          %p95 = pneg %p32
        $region26: #{tpu_custom_call.1} parent=23 // pred_check_branch
          %97 = sbr.rel (%p95) target = $region28
        $region27: #{tpu_custom_call.1} parent=23 // pred_region
          %98 = dma.done [#allocation3], 128
        $region28: #{tpu_custom_call.1} parent=23 // pred_fallthru
          _
        %p99 = pneg %p32
        %p100 = pneg %p29
        %p101 = pneg %p58
        %p102 = pneg %p55
        %s103 = sand.u32 %s45, 1
        %s104 = scalar_lea.sflag [#allocation4], %s103
        %s105 = sand.u32 %s45, 1
        %s106 = smul.addr %s105, 8
        %s107 = scalar_lea.vmem [#allocation5], %s106
        %v108 = vld [vmem:[#allocation2] sm:$0xff]
        %109 = vst [vmem:[%s107] sm:$0xff] %v108
        %s110 = sand.u32 %s45, 1
        %s111 = scalar_lea.sflag [#allocation4], %s110
        %s112 = sand.u32 %s45, 1
        %s113 = smul.addr %s112, 8
        %s114 = scalar_lea.vmem [#allocation5], %s113
        // Predicated region
        $region29: #{tpu_custom_call.1} parent=23 // pred_check
          %p115 = pneg %p55
        $region30: #{tpu_custom_call.1} parent=23 // pred_check_branch
          %117 = sbr.rel (%p115) target = $region32
        $region31: #{tpu_custom_call.1} parent=23 // pred_region
          %s119 = ssub.s32 128, 128
          %120 = vsyncadd %s111, %s119
          %s121 = smul.addr %s16, 128
          %s122 = scalar_lea.hbm %s1, %s121
          %s124 = sshll.u32 %s114, 4
          %s125 = int_to_ptr.vmem [resolvable:$true] %s124
          %127 = dma.vmem_to_hbm [thread:$0]  %s125, 128, %s122, %s111
        $region32: #{tpu_custom_call.1} parent=23 // pred_fallthru
          _
      $region24: #{tpu_custom_call.1} parent=5 // pred_fallthru
        _
      %p128 = scmp.le.s32.totalorder 2, %s11
      // Predicated region
      $region33: #{tpu_custom_call.1} parent=5 // pred_check
        %p129 = pneg %p128
      $region34: #{tpu_custom_call.1} parent=5 // pred_check_branch
        %131 = sbr.rel (%p129) target = $region36
      $region35: #{tpu_custom_call.1} parent=5 // pred_region
        %s132 = ssub.s32 %s11, 2
        // Predicated region
        $region37: #{tpu_custom_call.1} parent=35 // pred_check
          %p133 = pneg %p61
        $region38: #{tpu_custom_call.1} parent=35 // pred_check_branch
          %135 = sbr.rel (%p133) target = $region40
        $region39: #{tpu_custom_call.1} parent=35 // pred_region
          %s136 = sand.u32 %s46, 1
          %s137 = scalar_lea.sflag [#allocation4], %s136
          %s138 = sand.u32 %s46, 1
          %s139 = smul.addr %s138, 8
          %s140 = scalar_lea.vmem [#allocation5], %s139
          %141 = dma.done %s137, 128
        $region40: #{tpu_custom_call.1} parent=35 // pred_fallthru
          _
      $region36: #{tpu_custom_call.1} parent=5 // pred_fallthru
        _
    $region6: #{tpu_custom_call.1} parent=1 // loop_footer
      %s15 = sadd.s32 1, %s11
    $region7: #{tpu_custom_call.1} parent=1 // loop_footer_branch
      %10 = sbr.rel target = $region3
    $region8: #{tpu_custom_call.1} parent=1 // loop_exit
      _
    %142 = vsyncpa [#allocation3], 1
    %s143 = scalar_lea.sflag [#allocation3], 1
    %144 = vsyncpa %s143, 1
    %145 = vsyncpa [#allocation4], 1
    %s146 = scalar_lea.sflag [#allocation4], 1
    %147 = vsyncpa %s146, 1

// kernel: tpu_custom_call.1
$region0: #{tpu_custom_call.1}
  #allocation0 [shape = 'u32[]', space=smem, size = 0x4, offset = 0x4, fixed_abs, tag = 'smem constant byte address 0x4 - core index']
  #allocation1 [shape = 'u32[144,128]{1,0:T(1,128)}', space=vmem, size = 0x12000, scoped, tag = 'internal scratch']
  %s0 = inlined_call_operand.hbm [shape: f32[1,16,32], index: 0, kind: input, shape index: {}]
  %s1 = inlined_call_operand.hbm [shape: bf16[16,16], index: 1, kind: input, shape index: {}]
  %s2 = inlined_call_operand.hbm [shape: bf16[3,32,128], index: 2, kind: input, shape index: {}]
  %s3 = inlined_call_operand.hbm [shape: f32[1,128], index: 3, kind: input, shape index: {}]
  %s4 = inlined_call_operand.hbm [shape: f32[1,16,128], index: 4, kind: output, shape index: {}]
  %s5 = sld [smem:[#allocation0]]
  $region42: #{tpu_custom_call.1} parent=0
    _
  %s7 = ssub.s32 1, %s5
  %s8 = scalar_select 0, %s7, %s5
  $region1: #{tpu_custom_call.1} parent=0
    #allocation2 [shape = 'u8[8192]{0}', space=vmem, size = 0x2000, scoped, tag = 'input window, operand 0, single buffered']
    #allocation3 [shape = 's32[1]{0}', space=sflag, size = 0x4, scoped, tag = 'scoped memory for tpu_custom_call.1']
    #allocation4 [shape = 's32[1]{0}', space=sflag, size = 0x4, scoped, tag = 'scoped memory for tpu_custom_call.1']
    #allocation5 [shape = 'u8[4096]{0}', space=vmem, size = 0x1000, scoped, tag = 'input window, operand 1, single buffered']
    #allocation6 [shape = 's32[1]{0}', space=sflag, size = 0x4, scoped, tag = 'scoped memory for tpu_custom_call.1']
    #allocation7 [shape = 'u8[24576]{0}', space=vmem, size = 0x6000, scoped, tag = 'input window, operand 2, single buffered']
    #allocation8 [shape = 'u8[512]{0}', space=vmem, size = 0x400, scoped, tag = 'input window, operand 3, single buffered']
    #allocation9 [shape = 's32[1]{0}', space=sflag, size = 0x4, scoped, tag = 'scoped memory for tpu_custom_call.1']
    #allocation10 [shape = 'u8[8192]{0}', space=vmem, size = 0x2000, scoped, tag = 'output window, operand 0, single buffered']
    %9 = vsyncpa [#allocation3], 0
    %10 = vsyncpa [#allocation6], 0
    %11 = vsyncpa [#allocation9], 0
    %12 = vsyncpa [#allocation4], 0
    // Predicated region
    $region2: #{tpu_custom_call.1} parent=1 // pred_check
      _
    $region3: #{tpu_custom_call.1} parent=1 // pred_check_branch
      %14 = sbr.rel (0) target = $region5
    $region4: #{tpu_custom_call.1} parent=1 // pred_region
      %s16 = ssub.s32 256, 256
      %17 = vsyncadd [#allocation3], %s16
      %s18 = sshll.u32 [#allocation2], 4
      %s19 = int_to_ptr.vmem [resolvable:$true] %s18
      %24 = dma.hbm_to_vmem [thread:$0]  %s0, 256, %s19, [#allocation3], 128, 128, 8
    $region5: #{tpu_custom_call.1} parent=1 // pred_fallthru
      _
    // Predicated region
    $region6: #{tpu_custom_call.1} parent=1 // pred_check
      _
    $region7: #{tpu_custom_call.1} parent=1 // pred_check_branch
      %26 = sbr.rel (0) target = $region9
    $region8: #{tpu_custom_call.1} parent=1 // pred_region
      %s28 = ssub.s32 128, 128
      %29 = vsyncadd [#allocation6], %s28
      %s30 = sshll.u32 [#allocation5], 4
      %s31 = int_to_ptr.vmem [resolvable:$true] %s30
      %36 = dma.hbm_to_vmem [thread:$0]  %s1, 128, %s31, [#allocation6], 64, 64, 4
    $region9: #{tpu_custom_call.1} parent=1 // pred_fallthru
      _
    // Predicated region
    $region10: #{tpu_custom_call.1} parent=1 // pred_check
      _
    $region11: #{tpu_custom_call.1} parent=1 // pred_check_branch
      %38 = sbr.rel (0) target = $region13
    $region12: #{tpu_custom_call.1} parent=1 // pred_region
      %s40 = ssub.s32 768, 768
      %41 = vsyncadd [#allocation6], %s40
      %s42 = sshll.u32 [#allocation7], 4
      %s43 = int_to_ptr.vmem [resolvable:$true] %s42
      %48 = dma.hbm_to_vmem [thread:$0]  %s2, 768, %s43, [#allocation6], 64, 64, 4
    $region13: #{tpu_custom_call.1} parent=1 // pred_fallthru
      _
    // Predicated region
    $region14: #{tpu_custom_call.1} parent=1 // pred_check
      _
    $region15: #{tpu_custom_call.1} parent=1 // pred_check_branch
      %50 = sbr.rel (0) target = $region17
    $region16: #{tpu_custom_call.1} parent=1 // pred_region
      %s52 = ssub.s32 16, 16
      %53 = vsyncadd [#allocation9], %s52
      %s55 = sshll.u32 [#allocation8], 4
      %s56 = int_to_ptr.vmem [resolvable:$true] %s55
      %58 = dma.hbm_to_vmem [thread:$0]  %s3, 16, %s56, [#allocation9]
    $region17: #{tpu_custom_call.1} parent=1 // pred_fallthru
      _
    // Predicated region
    $region18: #{tpu_custom_call.1} parent=1 // pred_check
      _
    $region19: #{tpu_custom_call.1} parent=1 // pred_check_branch
      %60 = sbr.rel (0) target = $region21
    $region20: #{tpu_custom_call.1} parent=1 // pred_region
      %61 = dma.done [#allocation3], 256
    $region21: #{tpu_custom_call.1} parent=1 // pred_fallthru
      _
    // Predicated region
    $region22: #{tpu_custom_call.1} parent=1 // pred_check
      _
    $region23: #{tpu_custom_call.1} parent=1 // pred_check_branch
      %63 = sbr.rel (0) target = $region25
    $region24: #{tpu_custom_call.1} parent=1 // pred_region
      %64 = dma.done [#allocation6], 128
    $region25: #{tpu_custom_call.1} parent=1 // pred_fallthru
      _
    // Predicated region
    $region26: #{tpu_custom_call.1} parent=1 // pred_check
      _
    $region27: #{tpu_custom_call.1} parent=1 // pred_check_branch
      %66 = sbr.rel (0) target = $region29
    $region28: #{tpu_custom_call.1} parent=1 // pred_region
      %67 = dma.done [#allocation6], 768
    $region29: #{tpu_custom_call.1} parent=1 // pred_fallthru
      _
    // Predicated region
    $region30: #{tpu_custom_call.1} parent=1 // pred_check
      _
    $region31: #{tpu_custom_call.1} parent=1 // pred_check_branch
      %69 = sbr.rel (0) target = $region33
    $region32: #{tpu_custom_call.1} parent=1 // pred_region
      %70 = dma.done [#allocation9], 16
    $region33: #{tpu_custom_call.1} parent=1 // pred_fallthru
      _
    %v72 = vld [vmem:[#allocation5] sm:$0xf]
    %v73 = vld [vmem:[#allocation5 + $0x4] sm:$0xf]
    %v74 = vld [vmem:[#allocation2] sm:$0xff]
    %v75 = vld [vmem:[#allocation2 + $0x8] sm:$0xff]
    %v76 = vpack.c.bf16 %v75, %v74
    %v77 = vld [vmem:[#allocation8] sm:$0x1]
    %v78 = vld [vmem:[#allocation7] sm:$0xf]
    %v79 = vld [vmem:[#allocation7 + $0x4] sm:$0xf]
    %v80 = vld [vmem:[#allocation7 + $0x8] sm:$0xf]
    %v81 = vld [vmem:[#allocation7 + $0xc] sm:$0xf]
    %v86 = vunpack.c.l.b16 %v78
    %v87 = vunpack.c.l.b16 %v79
    %v88 = vunpack.c.l.b16 %v80
    %v89 = vunpack.c.l.b16 %v81
    %v90 = vpack.c.b16 %v87, %v86
    %v91 = vpack.c.b16 %v89, %v88
    %vm94 = vcmask 261120
    %v96 = vsel %vm94, %v76, 0
    %98 = vmatprep.subr.bf16.mxu0 0
    %99 = vmatpush1.bf16.msra.mxu0 %v90
    %100 = vmatprep.subr.bf16.mxu0 0
    %101 = vmatpush1.bf16.msra.mxu0 %v91
    %102 = vmatprep.subr.bf16.mxu0 0
    %103 = vmatpush1.bf16.msra.mxu0 0
    %104 = vmatprep.subr.bf16.mxu0 0
    %105 = vmatpush1.bf16.msra.mxu0 0
    %106 = vmatprep.subr.bf16.mxu0 0
    %107 = vmatpush1.bf16.msra.mxu0 0
    %108 = vmatprep.subr.bf16.mxu0 0
    %109 = vmatpush1.bf16.msra.mxu0 0
    %110 = vmatprep.subr.bf16.mxu0 0
    %111 = vmatpush1.bf16.msra.mxu0 0
    %112 = vmatprep.subr.bf16.mxu0 0
    %113 = vmatpush1.bf16.msra.mxu0 0
    %114 = vmatprep.subr.bf16.mxu0 0
    %115 = vmatpush1.bf16.msra.mxu0 0
    %116 = vmatprep.subr.bf16.mxu0 0
    %117 = vmatpush1.bf16.msra.mxu0 0
    %118 = vmatprep.subr.bf16.mxu0 0
    %119 = vmatpush1.bf16.msra.mxu0 0
    %120 = vmatprep.subr.bf16.mxu0 0
    %121 = vmatpush1.bf16.msra.mxu0 0
    %122 = vmatprep.subr.bf16.mxu0 0
    %123 = vmatpush1.bf16.msra.mxu0 0
    %124 = vmatprep.subr.bf16.mxu0 0
    %125 = vmatpush1.bf16.msra.mxu0 0
    %126 = vmatprep.subr.bf16.mxu0 0
    %127 = vmatpush1.bf16.msra.mxu0 0
    %128 = vmatprep.subr.bf16.mxu0 0
    %129 = vmatpush1.bf16.msra.mxu0 0
    %130 = vmatprep.mubr.bf16.mxu0 0
    %131 = vmatmul.mubr.bf16.gmra.mrb[0].mxu0 %v96
    %v132 = vpop.f32.mrb[0].mxu0
    %v133 = vadd.f32 0.0, %v132
    %v134 = vpop.f32.mrb[0].mxu0
    %v135 = vpop.f32.mrb[0].mxu0
    %v136 = vadd.f32 0.0, %v135
    %v137 = vpop.f32.mrb[0].mxu0
    %138 = vdwg.mxu0
    %v140 = vlaneseq
    %v141 = vshrl.u32 %v140, 7
    %v142 = vsub.s32 0, %v141
    %v143 = vrot.slane %v77, %v142
    %v145 = vadd.f32 %v143, %v133
    %v146 = vadd.f32 %v143, %v136
    %v149 = vunpack.c.l.b16 %v72
    %v150 = vunpack.c.l.b16 %v73
    %v151 = vpack.c.b16 %v150, %v149
    %vm152 = vcmask 130048
    %v154 = vsel %vm152, %v151, 0
    %156 = vmatprep.subr.bf16.mxu0 0
    %157 = vmatpush1.bf16.msra.mxu0 %v76
    %158 = vmatprep.subr.bf16.mxu0 0
    %159 = vmatpush1.bf16.msra.mxu0 0
    %160 = vmatprep.subr.bf16.mxu0 0
    %161 = vmatpush1.bf16.msra.mxu0 0
    %162 = vmatprep.subr.bf16.mxu0 0
    %163 = vmatpush1.bf16.msra.mxu0 0
    %164 = vmatprep.subr.bf16.mxu0 0
    %165 = vmatpush1.bf16.msra.mxu0 0
    %166 = vmatprep.subr.bf16.mxu0 0
    %167 = vmatpush1.bf16.msra.mxu0 0
    %168 = vmatprep.subr.bf16.mxu0 0
    %169 = vmatpush1.bf16.msra.mxu0 0
    %170 = vmatprep.subr.bf16.mxu0 0
    %171 = vmatpush1.bf16.msra.mxu0 0
    %172 = vmatprep.subr.bf16.mxu0 0
    %173 = vmatpush1.bf16.msra.mxu0 0
    %174 = vmatprep.subr.bf16.mxu0 0
    %175 = vmatpush1.bf16.msra.mxu0 0
    %176 = vmatprep.subr.bf16.mxu0 0
    %177 = vmatpush1.bf16.msra.mxu0 0
    %178 = vmatprep.subr.bf16.mxu0 0
    %179 = vmatpush1.bf16.msra.mxu0 0
    %180 = vmatprep.subr.bf16.mxu0 0
    %181 = vmatpush1.bf16.msra.mxu0 0
    %182 = vmatprep.subr.bf16.mxu0 0
    %183 = vmatpush1.bf16.msra.mxu0 0
    %184 = vmatprep.subr.bf16.mxu0 0
    %185 = vmatpush1.bf16.msra.mxu0 0
    %186 = vmatprep.subr.bf16.mxu0 0
    %187 = vmatpush1.bf16.msra.mxu0 0
    %188 = vmatprep.mubr.bf16.mxu0 0
    %189 = vmatmul.mubr.bf16.gmra.mrb[0].mxu0 %v154
    %v190 = vpop.f32.mrb[0].mxu0
    %v191 = vadd.f32 0.0, %v190
    %v192 = vpop.f32.mrb[0].mxu0
    %v193 = vpop.f32.mrb[0].mxu0
    %v194 = vadd.f32 0.0, %v193
    %v195 = vpop.f32.mrb[0].mxu0
    %196 = vdwg.mxu0
    %v197 = vpack.c.bf16 %v194, %v191
    %s198 = scalar_lea.vmem [#allocation7], 16
    %v199 = vld [vmem:[%s198] sm:$0xf]
    %v200 = vld [vmem:[%s198 + $0x4] sm:$0xf]
    %v201 = vld [vmem:[%s198 + $0x8] sm:$0xf]
    %v202 = vld [vmem:[%s198 + $0xc] sm:$0xf]
    %v207 = vunpack.c.l.b16 %v199
    %v208 = vunpack.c.l.b16 %v200
    %v209 = vunpack.c.l.b16 %v201
    %v210 = vunpack.c.l.b16 %v202
    %v211 = vpack.c.b16 %v208, %v207
    %v212 = vpack.c.b16 %v210, %v209
    %v216 = vsel %vm94, %v197, 0
    %218 = vmatprep.subr.bf16.mxu0 0
    %219 = vmatpush1.bf16.msra.mxu0 %v211
    %220 = vmatprep.subr.bf16.mxu0 0
    %221 = vmatpush1.bf16.msra.mxu0 %v212
    %222 = vmatprep.subr.bf16.mxu0 0
    %223 = vmatpush1.bf16.msra.mxu0 0
    %224 = vmatprep.subr.bf16.mxu0 0
    %225 = vmatpush1.bf16.msra.mxu0 0
    %226 = vmatprep.subr.bf16.mxu0 0
    %227 = vmatpush1.bf16.msra.mxu0 0
    %228 = vmatprep.subr.bf16.mxu0 0
    %229 = vmatpush1.bf16.msra.mxu0 0
    %230 = vmatprep.subr.bf16.mxu0 0
    %231 = vmatpush1.bf16.msra.mxu0 0
    %232 = vmatprep.subr.bf16.mxu0 0
    %233 = vmatpush1.bf16.msra.mxu0 0
    %234 = vmatprep.subr.bf16.mxu0 0
    %235 = vmatpush1.bf16.msra.mxu0 0
    %236 = vmatprep.subr.bf16.mxu0 0
    %237 = vmatpush1.bf16.msra.mxu0 0
    %238 = vmatprep.subr.bf16.mxu0 0
    %239 = vmatpush1.bf16.msra.mxu0 0
    %240 = vmatprep.subr.bf16.mxu0 0
    %241 = vmatpush1.bf16.msra.mxu0 0
    %242 = vmatprep.subr.bf16.mxu0 0
    %243 = vmatpush1.bf16.msra.mxu0 0
    %244 = vmatprep.subr.bf16.mxu0 0
    %245 = vmatpush1.bf16.msra.mxu0 0
    %246 = vmatprep.subr.bf16.mxu0 0
    %247 = vmatpush1.bf16.msra.mxu0 0
    %248 = vmatprep.subr.bf16.mxu0 0
    %249 = vmatpush1.bf16.msra.mxu0 0
    %250 = vmatprep.mubr.bf16.mxu0 0
    %251 = vmatmul.mubr.bf16.gmra.mrb[0].mxu0 %v216
    %v252 = vpop.f32.mrb[0].mxu0
    %v253 = vadd.f32 0.0, %v252
    %v254 = vpop.f32.mrb[0].mxu0
    %v255 = vpop.f32.mrb[0].mxu0
    %v256 = vadd.f32 0.0, %v255
    %v257 = vpop.f32.mrb[0].mxu0
    %258 = vdwg.mxu0
    %v259 = vadd.f32 %v145, %v253
    %v260 = vadd.f32 %v146, %v256
    %261 = vmatprep.subr.bf16.mxu0 0
    %262 = vmatpush1.bf16.msra.mxu0 %v197
    %263 = vmatprep.subr.bf16.mxu0 0
    %264 = vmatpush1.bf16.msra.mxu0 0
    %265 = vmatprep.subr.bf16.mxu0 0
    %266 = vmatpush1.bf16.msra.mxu0 0
    %267 = vmatprep.subr.bf16.mxu0 0
    %268 = vmatpush1.bf16.msra.mxu0 0
    %269 = vmatprep.subr.bf16.mxu0 0
    %270 = vmatpush1.bf16.msra.mxu0 0
    %271 = vmatprep.subr.bf16.mxu0 0
    %272 = vmatpush1.bf16.msra.mxu0 0
    %273 = vmatprep.subr.bf16.mxu0 0
    %274 = vmatpush1.bf16.msra.mxu0 0
    %275 = vmatprep.subr.bf16.mxu0 0
    %276 = vmatpush1.bf16.msra.mxu0 0
    %277 = vmatprep.subr.bf16.mxu0 0
    %278 = vmatpush1.bf16.msra.mxu0 0
    %279 = vmatprep.subr.bf16.mxu0 0
    %280 = vmatpush1.bf16.msra.mxu0 0
    %281 = vmatprep.subr.bf16.mxu0 0
    %282 = vmatpush1.bf16.msra.mxu0 0
    %283 = vmatprep.subr.bf16.mxu0 0
    %284 = vmatpush1.bf16.msra.mxu0 0
    %285 = vmatprep.subr.bf16.mxu0 0
    %286 = vmatpush1.bf16.msra.mxu0 0
    %287 = vmatprep.subr.bf16.mxu0 0
    %288 = vmatpush1.bf16.msra.mxu0 0
    %289 = vmatprep.subr.bf16.mxu0 0
    %290 = vmatpush1.bf16.msra.mxu0 0
    %291 = vmatprep.subr.bf16.mxu0 0
    %292 = vmatpush1.bf16.msra.mxu0 0
    %293 = vmatprep.mubr.bf16.mxu0 0
    %294 = vmatmul.mubr.bf16.gmra.mrb[0].mxu0 %v154
    %v295 = vpop.f32.mrb[0].mxu0
    %v296 = vadd.f32 0.0, %v295
    %v297 = vpop.f32.mrb[0].mxu0
    %v298 = vpop.f32.mrb[0].mxu0
    %v299 = vadd.f32 0.0, %v298
    %v300 = vpop.f32.mrb[0].mxu0
    %301 = vdwg.mxu0
    %v302 = vmul.f32 %v296, 2.0
    %v303 = vmul.f32 %v299, 2.0
    %v304 = vsub.f32 %v302, %v74
    %v305 = vsub.f32 %v303, %v75
    %v306 = vpack.c.bf16 %v305, %v304
    %s307 = scalar_lea.vmem [#allocation7], 32
    %v308 = vld [vmem:[%s307] sm:$0xf]
    %v309 = vld [vmem:[%s307 + $0x4] sm:$0xf]
    %v310 = vld [vmem:[%s307 + $0x8] sm:$0xf]
    %v311 = vld [vmem:[%s307 + $0xc] sm:$0xf]
    %v316 = vunpack.c.l.b16 %v308
    %v317 = vunpack.c.l.b16 %v309
    %v318 = vunpack.c.l.b16 %v310
    %v319 = vunpack.c.l.b16 %v311
    %v320 = vpack.c.b16 %v317, %v316
    %v321 = vpack.c.b16 %v319, %v318
    %v325 = vsel %vm94, %v306, 0
    %327 = vmatprep.subr.bf16.mxu0 0
    %328 = vmatpush1.bf16.msra.mxu0 %v320
    %329 = vmatprep.subr.bf16.mxu0 0
    %330 = vmatpush1.bf16.msra.mxu0 %v321
    %331 = vmatprep.subr.bf16.mxu0 0
    %332 = vmatpush1.bf16.msra.mxu0 0
    %333 = vmatprep.subr.bf16.mxu0 0
    %334 = vmatpush1.bf16.msra.mxu0 0
    %335 = vmatprep.subr.bf16.mxu0 0
    %336 = vmatpush1.bf16.msra.mxu0 0
    %337 = vmatprep.subr.bf16.mxu0 0
    %338 = vmatpush1.bf16.msra.mxu0 0
    %339 = vmatprep.subr.bf16.mxu0 0
    %340 = vmatpush1.bf16.msra.mxu0 0
    %341 = vmatprep.subr.bf16.mxu0 0
    %342 = vmatpush1.bf16.msra.mxu0 0
    %343 = vmatprep.subr.bf16.mxu0 0
    %344 = vmatpush1.bf16.msra.mxu0 0
    %345 = vmatprep.subr.bf16.mxu0 0
    %346 = vmatpush1.bf16.msra.mxu0 0
    %347 = vmatprep.subr.bf16.mxu0 0
    %348 = vmatpush1.bf16.msra.mxu0 0
    %349 = vmatprep.subr.bf16.mxu0 0
    %350 = vmatpush1.bf16.msra.mxu0 0
    %351 = vmatprep.subr.bf16.mxu0 0
    %352 = vmatpush1.bf16.msra.mxu0 0
    %353 = vmatprep.subr.bf16.mxu0 0
    %354 = vmatpush1.bf16.msra.mxu0 0
    %355 = vmatprep.subr.bf16.mxu0 0
    %356 = vmatpush1.bf16.msra.mxu0 0
    %357 = vmatprep.subr.bf16.mxu0 0
    %358 = vmatpush1.bf16.msra.mxu0 0
    %359 = vmatprep.mubr.bf16.mxu0 0
    %360 = vmatmul.mubr.bf16.gmra.mrb[0].mxu0 %v325
    %v361 = vpop.f32.mrb[0].mxu0
    %v362 = vadd.f32 0.0, %v361
    %v363 = vpop.f32.mrb[0].mxu0
    %v364 = vpop.f32.mrb[0].mxu0
    %v365 = vadd.f32 0.0, %v364
    %v366 = vpop.f32.mrb[0].mxu0
    %367 = vdwg.mxu0
    %v368 = vadd.f32 %v259, %v362
    %v369 = vadd.f32 %v260, %v365
    %370 = vst [vmem:[#allocation10] sm:$0xff] %v368
    %371 = vst [vmem:[#allocation10 + $0x8] sm:$0xff] %v369
    // Predicated region
    $region34: #{tpu_custom_call.1} parent=1 // pred_check
      _
    $region35: #{tpu_custom_call.1} parent=1 // pred_check_branch
      %373 = sbr.rel (0) target = $region37
    $region36: #{tpu_custom_call.1} parent=1 // pred_region
      %s375 = ssub.s32 256, 256
      %376 = vsyncadd [#allocation4], %s375
      %s377 = sshll.u32 [#allocation10], 4
      %s378 = int_to_ptr.vmem [resolvable:$true] %s377
      %383 = dma.vmem_to_hbm [thread:$0]  %s378, 256, %s4, [#allocation4], 128, 128, 8
    $region37: #{tpu_custom_call.1} parent=1 // pred_fallthru
      _
    // Predicated region
    $region38: #{tpu_custom_call.1} parent=1 // pred_check
      _
    $region39: #{tpu_custom_call.1} parent=1 // pred_check_branch
      %385 = sbr.rel (0) target = $region41
    $region40: #{tpu_custom_call.1} parent=1 // pred_region
      %386 = dma.done [#allocation4], 256
    $region41: #{tpu_custom_call.1} parent=1 // pred_fallthru
      _
    %387 = vsyncpa [#allocation3], 1
    %388 = vsyncpa [#allocation6], 1
    %389 = vsyncpa [#allocation9], 1
    %390 = vsyncpa [#allocation4], 1

</llo_original>
